<compile_context>
chip_gen: v7x
topology: tpu7x:2x2x1
jax: 0.10.0
libtpu: 0.0.40
codegen_flags: <defaults>
</compile_context>

<pallas_src>
import functools

import jax
import jax.numpy as jnp
from jax.experimental import pallas as pl
from jax.experimental.pallas import tpu as pltpu

LANES = 128
MAX_BLOCK_ROWS = 2048  # (2048, 128) f32 = 1 MiB per input tile


def _dice_bce_kernel(x_ref, t_ref, out_ref,
                     acc_i, acc_p, acc_t, acc_b,
                     *, rows_total, block_rows, n_valid, smooth):
    i = pl.program_id(0)
    last = pl.num_programs(0) - 1

    @pl.when(i == 0)
    def _init():
        acc_i[...] = jnp.zeros_like(acc_i)
        acc_p[...] = jnp.zeros_like(acc_p)
        acc_t[...] = jnp.zeros_like(acc_t)
        acc_b[...] = jnp.zeros_like(acc_b)

    def accumulate(x, t):
        p = jax.nn.sigmoid(x)
        # PyTorch binary_cross_entropy clamps the log terms at -100.
        log_p = jnp.maximum(jnp.log(p), -100.0)
        log_1mp = jnp.maximum(jnp.log(1.0 - p), -100.0)
        bce = -(t * log_p + (1.0 - t) * log_1mp)
        # Per-lane partial sums: sublane-axis reduction is mostly vreg-wise
        # VPU adds; the cross-lane (XLU) reduce only happens on the last step.
        acc_i[...] += jnp.sum(p * t, axis=0, keepdims=True)
        acc_p[...] += jnp.sum(p, axis=0, keepdims=True)
        acc_t[...] += jnp.sum(t, axis=0, keepdims=True)
        acc_b[...] += jnp.sum(bce, axis=0, keepdims=True)

    @pl.when(i < last)
    def _fast():
        # Unmasked fast path for all full blocks.
        accumulate(x_ref[...].astype(jnp.float32),
                   t_ref[...].astype(jnp.float32))

    @pl.when(i == last)
    def _tail_and_finalize():
        x = x_ref[...].astype(jnp.float32)
        t = t_ref[...].astype(jnp.float32)
        # Rows past rows_total in this block are out-of-bounds (undefined
        # data); replace them so they contribute exactly 0 to every sum:
        # sigmoid(-1e4) == 0, both clamped log terms give 0 with t == 0.
        valid_rows = rows_total - i * block_rows
        row_id = jax.lax.broadcasted_iota(jnp.int32, (block_rows, 1), 0)
        rv = row_id < valid_rows
        x = jnp.where(rv, x, -1e4)
        t = jnp.where(rv, t, 0.0)
        accumulate(x, t)

        intersection = jnp.sum(acc_i[...])
        sum_p = jnp.sum(acc_p[...])
        sum_t = jnp.sum(acc_t[...])
        bce_mean = jnp.sum(acc_b[...]) / jnp.float32(n_valid)
        dice_loss = 1.0 - (2.0 * intersection + smooth) / (sum_p + sum_t + smooth)
        out_ref[0, 0] = bce_mean + dice_loss


def dice_bce_loss(inputs, targets, smooth=1.0):
    """Pallas implementation of DiceBCELoss.forward (scalar f32 result)."""
    x = jnp.reshape(inputs, (-1,))
    t = jnp.reshape(targets, (-1,))
    n_valid = x.shape[0]

    # Align to whole 128-lane rows. This pad (one extra HBM pass) only
    # happens when numel % 128 != 0; the sentinel values contribute exactly
    # 0 to every accumulated sum.
    rem = (-n_valid) % LANES
    if rem:
        x = jnp.pad(x, (0, rem), constant_values=-1e4)
        t = jnp.pad(t, (0, rem), constant_values=0)
    rows = (n_valid + rem) // LANES

    block_rows = rows if rows <= MAX_BLOCK_ROWS else MAX_BLOCK_ROWS
    grid = (pl.cdiv(rows, block_rows),)

    x2 = x.reshape(rows, LANES)   # free reshape, no dtype copy
    t2 = t.reshape(rows, LANES)

    kernel = functools.partial(
        _dice_bce_kernel,
        rows_total=rows,
        block_rows=block_rows,
        n_valid=n_valid,
        smooth=float(smooth),
    )

    out = pl.pallas_call(
        kernel,
        out_shape=jax.ShapeDtypeStruct((1, 1), jnp.float32),
        grid_spec=pltpu.PrefetchScalarGridSpec(
            num_scalar_prefetch=0,
            grid=grid,
            in_specs=[
                pl.BlockSpec((block_rows, LANES), lambda i: (i, 0)),
                pl.BlockSpec((block_rows, LANES), lambda i: (i, 0)),
            ],
            out_specs=pl.BlockSpec(
                (1, 1), lambda i: (0, 0), memory_space=pltpu.SMEM
            ),
            scratch_shapes=[pltpu.VMEM((1, LANES), jnp.float32)] * 4,
        ),
        compiler_params=pltpu.CompilerParams(
            dimension_semantics=("arbitrary",),
        ),
    )(x2, t2)
    return out[0, 0]


def _reference(inputs, targets, smooth=1.0):
    p = jax.nn.sigmoid(inputs.astype(jnp.float32)).reshape(-1)
    t = targets.astype(jnp.float32).reshape(-1)
    intersection = jnp.sum(p * t)
    dice_loss = 1.0 - (2.0 * intersection + smooth) / (
        jnp.sum(p) + jnp.sum(t) + smooth
    )
    eps_log = lambda v: jnp.maximum(jnp.log(v), -100.0)
    bce = jnp.mean(-(t * eps_log(p) + (1.0 - t) * eps_log(1.0 - p)))
    return bce + dice_loss


if __name__ == "__main__":
    key = jax.random.PRNGKey(0)
    k1, k2 = jax.random.split(key)
    # NCHW-like shape consistent with a segmentation head
    shape = (2, 4, 16, 16)
    logits = jax.random.normal(k1, shape, dtype=jnp.float32)
    targets = (jax.random.uniform(k2, shape) > 0.5).astype(jnp.float32)

    loss = dice_bce_loss(logits, targets, smooth=1.0)
    jax.block_until_ready(loss)

    ref = _reference(logits, targets, smooth=1.0)
    assert jnp.allclose(loss, ref, rtol=1e-5, atol=1e-5), (loss, ref)
    print("KERNEL_OK")
</pallas_src>

<mosaic_0001>
module attributes {stable_mosaic.version = 11 : i64} {
  func.func @_dice_bce_kernel(%arg0: i32, %arg1: memref<16x128xf32, #tpu.memory_space<vmem>>, %arg2: memref<16x128xf32, #tpu.memory_space<vmem>>, %arg3: memref<1x1xf32, #tpu.memory_space<smem>>, %arg4: memref<1x128xf32, #tpu.memory_space<vmem>>, %arg5: memref<1x128xf32, #tpu.memory_space<vmem>>, %arg6: memref<1x128xf32, #tpu.memory_space<vmem>>, %arg7: memref<1x128xf32, #tpu.memory_space<vmem>>) attributes {dimension_semantics = [#tpu.dimension_semantics<arbitrary>], iteration_bounds = array<i64: 1>, scalar_prefetch = 0 : i64, scratch_operands = 4 : i64, tpu.core_type = #tpu.core_type<tc>, window_params = [{transform_indices = @transform_0, window_bounds = array<i64: 16, 128>}, {transform_indices = @transform_1, window_bounds = array<i64: 16, 128>}, {transform_indices = @transform_2, window_bounds = array<i64: 1, 1>}]} {
    %c0_i32 = arith.constant 0 : i32
    %0 = arith.cmpi eq, %arg0, %c0_i32 : i32
    %1 = arith.extui %0 : i1 to i32
    %c0_i32_0 = arith.constant 0 : i32
    %2 = arith.cmpi ne, %1, %c0_i32_0 : i32
    scf.if %2 {
      %cst = arith.constant 0.000000e+00 : f32
      %9 = vector.broadcast %cst : f32 to vector<1x128xf32>
      %c0 = arith.constant 0 : index
      %c0_5 = arith.constant 0 : index
      %10 = vector.load %arg4[%c0, %c0_5] : memref<1x128xf32, #tpu.memory_space<vmem>>, vector<1x128xf32>
      tpu.vector_store %arg4[%c0, %c0_5], %9 {strides = array<i32>} : memref<1x128xf32, #tpu.memory_space<vmem>>, vector<1x128xf32>,
      %cst_6 = arith.constant 0.000000e+00 : f32
      %11 = vector.broadcast %cst_6 : f32 to vector<1x128xf32>
      %c0_7 = arith.constant 0 : index
      %c0_8 = arith.constant 0 : index
      %12 = vector.load %arg5[%c0_7, %c0_8] : memref<1x128xf32, #tpu.memory_space<vmem>>, vector<1x128xf32>
      tpu.vector_store %arg5[%c0_7, %c0_8], %11 {strides = array<i32>} : memref<1x128xf32, #tpu.memory_space<vmem>>, vector<1x128xf32>,
      %cst_9 = arith.constant 0.000000e+00 : f32
      %13 = vector.broadcast %cst_9 : f32 to vector<1x128xf32>
      %c0_10 = arith.constant 0 : index
      %c0_11 = arith.constant 0 : index
      %14 = vector.load %arg6[%c0_10, %c0_11] : memref<1x128xf32, #tpu.memory_space<vmem>>, vector<1x128xf32>
      tpu.vector_store %arg6[%c0_10, %c0_11], %13 {strides = array<i32>} : memref<1x128xf32, #tpu.memory_space<vmem>>, vector<1x128xf32>,
      %cst_12 = arith.constant 0.000000e+00 : f32
      %15 = vector.broadcast %cst_12 : f32 to vector<1x128xf32>
      %c0_13 = arith.constant 0 : index
      %c0_14 = arith.constant 0 : index
      %16 = vector.load %arg7[%c0_13, %c0_14] : memref<1x128xf32, #tpu.memory_space<vmem>>, vector<1x128xf32>
      tpu.vector_store %arg7[%c0_13, %c0_14], %15 {strides = array<i32>} : memref<1x128xf32, #tpu.memory_space<vmem>>, vector<1x128xf32>,
    } else {
    }
    %c0_i32_1 = arith.constant 0 : i32
    %3 = arith.cmpi slt, %arg0, %c0_i32_1 : i32
    %4 = arith.extui %3 : i1 to i32
    %c0_i32_2 = arith.constant 0 : i32
    %5 = arith.cmpi ne, %4, %c0_i32_2 : i32
    scf.if %5 {
      %c0 = arith.constant 0 : index
      %c0_5 = arith.constant 0 : index
      %9 = vector.load %arg1[%c0, %c0_5] : memref<16x128xf32, #tpu.memory_space<vmem>>, vector<16x128xf32>
      %c0_6 = arith.constant 0 : index
      %c0_7 = arith.constant 0 : index
      %10 = vector.load %arg2[%c0_6, %c0_7] : memref<16x128xf32, #tpu.memory_space<vmem>>, vector<16x128xf32>
      %11 = arith.negf %9 : vector<16x128xf32>
      %12 = math.exp %11 : vector<16x128xf32>
      %cst = arith.constant 1.000000e+00 : f32
      %13 = vector.broadcast %cst : f32 to vector<16x128xf32>
      %14 = arith.addf %13, %12 : vector<16x128xf32>
      %15 = arith.divf %13, %14 : vector<16x128xf32>
      %16 = math.log %15 : vector<16x128xf32>
      %cst_8 = arith.constant -1.000000e+02 : f32
      %17 = vector.broadcast %cst_8 : f32 to vector<16x128xf32>
      %18 = arith.maximumf %16, %17 : vector<16x128xf32>
      %cst_9 = arith.constant 1.000000e+00 : f32
      %19 = vector.broadcast %cst_9 : f32 to vector<16x128xf32>
      %20 = arith.subf %19, %15 : vector<16x128xf32>
      %21 = math.log %20 : vector<16x128xf32>
      %cst_10 = arith.constant -1.000000e+02 : f32
      %22 = vector.broadcast %cst_10 : f32 to vector<16x128xf32>
      %23 = arith.maximumf %21, %22 : vector<16x128xf32>
      %24 = arith.mulf %10, %18 : vector<16x128xf32>
      %cst_11 = arith.constant 1.000000e+00 : f32
      %25 = vector.broadcast %cst_11 : f32 to vector<16x128xf32>
      %26 = arith.subf %25, %10 : vector<16x128xf32>
      %27 = arith.mulf %26, %23 : vector<16x128xf32>
      %28 = arith.addf %24, %27 : vector<16x128xf32>
      %cst_12 = arith.constant 0.000000e+00 : f32
      %29 = vector.broadcast %cst_12 : f32 to vector<16x128xf32>
      %30 = arith.subf %29, %28 : vector<16x128xf32>
      %c0_13 = arith.constant 0 : index
      %c0_14 = arith.constant 0 : index
      %31 = vector.load %arg4[%c0_13, %c0_14] : memref<1x128xf32, #tpu.memory_space<vmem>>, vector<1x128xf32>
      %32 = arith.mulf %15, %10 : vector<16x128xf32>
      %cst_15 = arith.constant dense<0.000000e+00> : vector<128xf32>
      %33 = vector.multi_reduction <add>, %32, %cst_15 [0] : vector<16x128xf32> to vector<128xf32>
      %34 = vector.shape_cast %33 : vector<128xf32> to vector<1x128xf32>
      %35 = arith.addf %31, %34 : vector<1x128xf32>
      %c0_16 = arith.constant 0 : index
      %c0_17 = arith.constant 0 : index
      %36 = vector.load %arg4[%c0_16, %c0_17] : memref<1x128xf32, #tpu.memory_space<vmem>>, vector<1x128xf32>
      tpu.vector_store %arg4[%c0_16, %c0_17], %35 {strides = array<i32>} : memref<1x128xf32, #tpu.memory_space<vmem>>, vector<1x128xf32>,
      %c0_18 = arith.constant 0 : index
      %c0_19 = arith.constant 0 : index
      %37 = vector.load %arg5[%c0_18, %c0_19] : memref<1x128xf32, #tpu.memory_space<vmem>>, vector<1x128xf32>
      %cst_20 = arith.constant dense<0.000000e+00> : vector<128xf32>
      %38 = vector.multi_reduction <add>, %15, %cst_20 [0] : vector<16x128xf32> to vector<128xf32>
      %39 = vector.shape_cast %38 : vector<128xf32> to vector<1x128xf32>
      %40 = arith.addf %37, %39 : vector<1x128xf32>
      %c0_21 = arith.constant 0 : index
      %c0_22 = arith.constant 0 : index
      %41 = vector.load %arg5[%c0_21, %c0_22] : memref<1x128xf32, #tpu.memory_space<vmem>>, vector<1x128xf32>
      tpu.vector_store %arg5[%c0_21, %c0_22], %40 {strides = array<i32>} : memref<1x128xf32, #tpu.memory_space<vmem>>, vector<1x128xf32>,
      %c0_23 = arith.constant 0 : index
      %c0_24 = arith.constant 0 : index
      %42 = vector.load %arg6[%c0_23, %c0_24] : memref<1x128xf32, #tpu.memory_space<vmem>>, vector<1x128xf32>
      %cst_25 = arith.constant dense<0.000000e+00> : vector<128xf32>
      %43 = vector.multi_reduction <add>, %10, %cst_25 [0] : vector<16x128xf32> to vector<128xf32>
      %44 = vector.shape_cast %43 : vector<128xf32> to vector<1x128xf32>
      %45 = arith.addf %42, %44 : vector<1x128xf32>
      %c0_26 = arith.constant 0 : index
      %c0_27 = arith.constant 0 : index
      %46 = vector.load %arg6[%c0_26, %c0_27] : memref<1x128xf32, #tpu.memory_space<vmem>>, vector<1x128xf32>
      tpu.vector_store %arg6[%c0_26, %c0_27], %45 {strides = array<i32>} : memref<1x128xf32, #tpu.memory_space<vmem>>, vector<1x128xf32>,
      %c0_28 = arith.constant 0 : index
      %c0_29 = arith.constant 0 : index
      %47 = vector.load %arg7[%c0_28, %c0_29] : memref<1x128xf32, #tpu.memory_space<vmem>>, vector<1x128xf32>
      %cst_30 = arith.constant dense<0.000000e+00> : vector<128xf32>
      %48 = vector.multi_reduction <add>, %30, %cst_30 [0] : vector<16x128xf32> to vector<128xf32>
      %49 = vector.shape_cast %48 : vector<128xf32> to vector<1x128xf32>
      %50 = arith.addf %47, %49 : vector<1x128xf32>
      %c0_31 = arith.constant 0 : index
      %c0_32 = arith.constant 0 : index
      %51 = vector.load %arg7[%c0_31, %c0_32] : memref<1x128xf32, #tpu.memory_space<vmem>>, vector<1x128xf32>
      tpu.vector_store %arg7[%c0_31, %c0_32], %50 {strides = array<i32>} : memref<1x128xf32, #tpu.memory_space<vmem>>, vector<1x128xf32>,
    } else {
    }
    %c0_i32_3 = arith.constant 0 : i32
    %6 = arith.cmpi eq, %arg0, %c0_i32_3 : i32
    %7 = arith.extui %6 : i1 to i32
    %c0_i32_4 = arith.constant 0 : i32
    %8 = arith.cmpi ne, %7, %c0_i32_4 : i32
    scf.if %8 {
      %c0 = arith.constant 0 : index
      %c0_5 = arith.constant 0 : index
      %9 = vector.load %arg1[%c0, %c0_5] : memref<16x128xf32, #tpu.memory_space<vmem>>, vector<16x128xf32>
      %c0_6 = arith.constant 0 : index
      %c0_7 = arith.constant 0 : index
      %10 = vector.load %arg2[%c0_6, %c0_7] : memref<16x128xf32, #tpu.memory_space<vmem>>, vector<16x128xf32>
      %c16_i32 = arith.constant 16 : i32
      %11 = arith.muli %arg0, %c16_i32 : i32
      %c16_i32_8 = arith.constant 16 : i32
      %12 = arith.subi %c16_i32_8, %11 : i32
      %13 = tpu.iota {dimensions = array<i32: 0>} : vector<16x1xi32>
      %14 = vector.broadcast %12 : i32 to vector<16x1xi32>
      %15 = arith.cmpi slt, %13, %14 : vector<16x1xi32>
      %cst = arith.constant -1.000000e+04 : f32
      %16 = vector.shape_cast %15 : vector<16x1xi1> to vector<16x1xi1>
      %17 = vector.broadcast %16 : vector<16x1xi1> to vector<16x128xi1>
      %18 = vector.broadcast %cst : f32 to vector<16x128xf32>
      %19 = arith.select %17, %9, %18 : vector<16x128xi1>, vector<16x128xf32>
      %cst_9 = arith.constant 0.000000e+00 : f32
      %20 = vector.shape_cast %15 : vector<16x1xi1> to vector<16x1xi1>
      %21 = vector.broadcast %20 : vector<16x1xi1> to vector<16x128xi1>
      %22 = vector.broadcast %cst_9 : f32 to vector<16x128xf32>
      %23 = arith.select %21, %10, %22 : vector<16x128xi1>, vector<16x128xf32>
      %24 = arith.negf %19 : vector<16x128xf32>
      %25 = math.exp %24 : vector<16x128xf32>
      %cst_10 = arith.constant 1.000000e+00 : f32
      %26 = vector.broadcast %cst_10 : f32 to vector<16x128xf32>
      %27 = arith.addf %26, %25 : vector<16x128xf32>
      %28 = arith.divf %26, %27 : vector<16x128xf32>
      %29 = math.log %28 : vector<16x128xf32>
      %cst_11 = arith.constant -1.000000e+02 : f32
      %30 = vector.broadcast %cst_11 : f32 to vector<16x128xf32>
      %31 = arith.maximumf %29, %30 : vector<16x128xf32>
      %cst_12 = arith.constant 1.000000e+00 : f32
      %32 = vector.broadcast %cst_12 : f32 to vector<16x128xf32>
      %33 = arith.subf %32, %28 : vector<16x128xf32>
      %34 = math.log %33 : vector<16x128xf32>
      %cst_13 = arith.constant -1.000000e+02 : f32
      %35 = vector.broadcast %cst_13 : f32 to vector<16x128xf32>
      %36 = arith.maximumf %34, %35 : vector<16x128xf32>
      %37 = arith.mulf %23, %31 : vector<16x128xf32>
      %cst_14 = arith.constant 1.000000e+00 : f32
      %38 = vector.broadcast %cst_14 : f32 to vector<16x128xf32>
      %39 = arith.subf %38, %23 : vector<16x128xf32>
      %40 = arith.mulf %39, %36 : vector<16x128xf32>
      %41 = arith.addf %37, %40 : vector<16x128xf32>
      %cst_15 = arith.constant 0.000000e+00 : f32
      %42 = vector.broadcast %cst_15 : f32 to vector<16x128xf32>
      %43 = arith.subf %42, %41 : vector<16x128xf32>
      %c0_16 = arith.constant 0 : index
      %c0_17 = arith.constant 0 : index
      %44 = vector.load %arg4[%c0_16, %c0_17] : memref<1x128xf32, #tpu.memory_space<vmem>>, vector<1x128xf32>
      %45 = arith.mulf %28, %23 : vector<16x128xf32>
      %cst_18 = arith.constant dense<0.000000e+00> : vector<128xf32>
      %46 = vector.multi_reduction <add>, %45, %cst_18 [0] : vector<16x128xf32> to vector<128xf32>
      %47 = vector.shape_cast %46 : vector<128xf32> to vector<1x128xf32>
      %48 = arith.addf %44, %47 : vector<1x128xf32>
      %c0_19 = arith.constant 0 : index
      %c0_20 = arith.constant 0 : index
      %49 = vector.load %arg4[%c0_19, %c0_20] : memref<1x128xf32, #tpu.memory_space<vmem>>, vector<1x128xf32>
      tpu.vector_store %arg4[%c0_19, %c0_20], %48 {strides = array<i32>} : memref<1x128xf32, #tpu.memory_space<vmem>>, vector<1x128xf32>,
      %c0_21 = arith.constant 0 : index
      %c0_22 = arith.constant 0 : index
      %50 = vector.load %arg5[%c0_21, %c0_22] : memref<1x128xf32, #tpu.memory_space<vmem>>, vector<1x128xf32>
      %cst_23 = arith.constant dense<0.000000e+00> : vector<128xf32>
      %51 = vector.multi_reduction <add>, %28, %cst_23 [0] : vector<16x128xf32> to vector<128xf32>
      %52 = vector.shape_cast %51 : vector<128xf32> to vector<1x128xf32>
      %53 = arith.addf %50, %52 : vector<1x128xf32>
      %c0_24 = arith.constant 0 : index
      %c0_25 = arith.constant 0 : index
      %54 = vector.load %arg5[%c0_24, %c0_25] : memref<1x128xf32, #tpu.memory_space<vmem>>, vector<1x128xf32>
      tpu.vector_store %arg5[%c0_24, %c0_25], %53 {strides = array<i32>} : memref<1x128xf32, #tpu.memory_space<vmem>>, vector<1x128xf32>,
      %c0_26 = arith.constant 0 : index
      %c0_27 = arith.constant 0 : index
      %55 = vector.load %arg6[%c0_26, %c0_27] : memref<1x128xf32, #tpu.memory_space<vmem>>, vector<1x128xf32>
      %cst_28 = arith.constant dense<0.000000e+00> : vector<128xf32>
      %56 = vector.multi_reduction <add>, %23, %cst_28 [0] : vector<16x128xf32> to vector<128xf32>
      %57 = vector.shape_cast %56 : vector<128xf32> to vector<1x128xf32>
      %58 = arith.addf %55, %57 : vector<1x128xf32>
      %c0_29 = arith.constant 0 : index
      %c0_30 = arith.constant 0 : index
      %59 = vector.load %arg6[%c0_29, %c0_30] : memref<1x128xf32, #tpu.memory_space<vmem>>, vector<1x128xf32>
      tpu.vector_store %arg6[%c0_29, %c0_30], %58 {strides = array<i32>} : memref<1x128xf32, #tpu.memory_space<vmem>>, vector<1x128xf32>,
      %c0_31 = arith.constant 0 : index
      %c0_32 = arith.constant 0 : index
      %60 = vector.load %arg7[%c0_31, %c0_32] : memref<1x128xf32, #tpu.memory_space<vmem>>, vector<1x128xf32>
      %cst_33 = arith.constant dense<0.000000e+00> : vector<128xf32>
      %61 = vector.multi_reduction <add>, %43, %cst_33 [0] : vector<16x128xf32> to vector<128xf32>
      %62 = vector.shape_cast %61 : vector<128xf32> to vector<1x128xf32>
      %63 = arith.addf %60, %62 : vector<1x128xf32>
      %c0_34 = arith.constant 0 : index
      %c0_35 = arith.constant 0 : index
      %64 = vector.load %arg7[%c0_34, %c0_35] : memref<1x128xf32, #tpu.memory_space<vmem>>, vector<1x128xf32>
      tpu.vector_store %arg7[%c0_34, %c0_35], %63 {strides = array<i32>} : memref<1x128xf32, #tpu.memory_space<vmem>>, vector<1x128xf32>,
      %c0_36 = arith.constant 0 : index
      %c0_37 = arith.constant 0 : index
      %65 = vector.load %arg4[%c0_36, %c0_37] : memref<1x128xf32, #tpu.memory_space<vmem>>, vector<1x128xf32>
      %66 = vector.shape_cast %65 : vector<1x128xf32> to vector<1x1x128xf32>
      %cst_38 = arith.constant dense<0.000000e+00> : vector<1xf32>
      %67 = vector.multi_reduction <add>, %66, %cst_38 [1, 2] : vector<1x1x128xf32> to vector<1xf32>
      %68 = vector.shape_cast %67 : vector<1xf32> to vector<1x1x1xf32>
      %69 = vector.extract %68[0, 0, 0] : f32 from vector<1x1x1xf32>
      %c0_39 = arith.constant 0 : index
      %c0_40 = arith.constant 0 : index
      %70 = vector.load %arg5[%c0_39, %c0_40] : memref<1x128xf32, #tpu.memory_space<vmem>>, vector<1x128xf32>
      %71 = vector.shape_cast %70 : vector<1x128xf32> to vector<1x1x128xf32>
      %cst_41 = arith.constant dense<0.000000e+00> : vector<1xf32>
      %72 = vector.multi_reduction <add>, %71, %cst_41 [1, 2] : vector<1x1x128xf32> to vector<1xf32>
      %73 = vector.shape_cast %72 : vector<1xf32> to vector<1x1x1xf32>
      %74 = vector.extract %73[0, 0, 0] : f32 from vector<1x1x1xf32>
      %c0_42 = arith.constant 0 : index
      %c0_43 = arith.constant 0 : index
      %75 = vector.load %arg6[%c0_42, %c0_43] : memref<1x128xf32, #tpu.memory_space<vmem>>, vector<1x128xf32>
      %76 = vector.shape_cast %75 : vector<1x128xf32> to vector<1x1x128xf32>
      %cst_44 = arith.constant dense<0.000000e+00> : vector<1xf32>
      %77 = vector.multi_reduction <add>, %76, %cst_44 [1, 2] : vector<1x1x128xf32> to vector<1xf32>
      %78 = vector.shape_cast %77 : vector<1xf32> to vector<1x1x1xf32>
      %79 = vector.extract %78[0, 0, 0] : f32 from vector<1x1x1xf32>
      %c0_45 = arith.constant 0 : index
      %c0_46 = arith.constant 0 : index
      %80 = vector.load %arg7[%c0_45, %c0_46] : memref<1x128xf32, #tpu.memory_space<vmem>>, vector<1x128xf32>
      %81 = vector.shape_cast %80 : vector<1x128xf32> to vector<1x1x128xf32>
      %cst_47 = arith.constant dense<0.000000e+00> : vector<1xf32>
      %82 = vector.multi_reduction <add>, %81, %cst_47 [1, 2] : vector<1x1x128xf32> to vector<1xf32>
      %83 = vector.shape_cast %82 : vector<1xf32> to vector<1x1x1xf32>
      %84 = vector.extract %83[0, 0, 0] : f32 from vector<1x1x1xf32>
      %cst_48 = arith.constant 2.048000e+03 : f32
      %85 = arith.divf %84, %cst_48 : f32
      %cst_49 = arith.constant 2.000000e+00 : f32
      %86 = arith.mulf %cst_49, %69 : f32
      %cst_50 = arith.constant 1.000000e+00 : f32
      %87 = arith.addf %86, %cst_50 : f32
      %88 = arith.addf %74, %79 : f32
      %cst_51 = arith.constant 1.000000e+00 : f32
      %89 = arith.addf %88, %cst_51 : f32
      %90 = arith.divf %87, %89 : f32
      %cst_52 = arith.constant 1.000000e+00 : f32
      %91 = arith.subf %cst_52, %90 : f32
      %92 = arith.addf %85, %91 : f32
      %c0_53 = arith.constant 0 : index
      %c0_54 = arith.constant 0 : index
      %93 = memref.load %arg3[%c0_53, %c0_54] : memref<1x1xf32, #tpu.memory_space<smem>>
      memref.store %92, %arg3[%c0_53, %c0_54] : memref<1x1xf32, #tpu.memory_space<smem>>
    } else {
    }
    return
  }
  func.func @transform_0(%arg0: i32) -> (i32, i32) {
    %c0_i32 = arith.constant 0 : i32
    %c0_i32_0 = arith.constant 0 : i32
    return %arg0, %c0_i32 : i32, i32
  }
  func.func @transform_1(%arg0: i32) -> (i32, i32) {
    %c0_i32 = arith.constant 0 : i32
    %c0_i32_0 = arith.constant 0 : i32
    return %arg0, %c0_i32 : i32, i32
  }
  func.func @transform_2(%arg0: i32) -> (i32, i32) {
    %c0_i32 = arith.constant 0 : i32
    %c0_i32_0 = arith.constant 0 : i32
    %c0_i32_1 = arith.constant 0 : i32
    return %c0_i32, %c0_i32_0 : i32, i32
  }
}

</mosaic_0001>

<llo_original>
// kernel: tpu_custom_call.1
$region0: #{tpu_custom_call.1}
  #allocation0 [shape = 'u32[]', space=smem, size = 0x4, offset = 0x4, fixed_abs, tag = 'smem constant byte address 0x4 - core index']
  #allocation1 [shape = 'u32[144,128]{1,0:T(1,128)}', space=vmem, size = 0x12000, scoped, tag = 'internal scratch']
  #allocation2 [shape = 'f32[1,128]{1,0:T(1,128)}', space=vmem, size = 0x200, scoped, tag = 'scratch operand']
  #allocation3 [shape = 'f32[1,128]{1,0:T(1,128)}', space=vmem, size = 0x200, scoped, tag = 'scratch operand']
  #allocation4 [shape = 'f32[1,128]{1,0:T(1,128)}', space=vmem, size = 0x200, scoped, tag = 'scratch operand']
  #allocation5 [shape = 'f32[1,128]{1,0:T(1,128)}', space=vmem, size = 0x200, scoped, tag = 'scratch operand']
  %s0 = inlined_call_operand.hbm [shape: f32[16,128], index: 0, kind: input, shape index: {}]
  %s1 = inlined_call_operand.hbm [shape: f32[16,128], index: 1, kind: input, shape index: {}]
  %s2 = inlined_call_operand.hbm [shape: f32[1,1], index: 2, kind: output, shape index: {}]
  %s3 = sld [smem:[#allocation0]]
  $region38: #{tpu_custom_call.1} parent=0
    _
  %s5 = ssub.s32 1, %s3
  %s6 = scalar_select 0, %s5, %s3
  $region1: #{tpu_custom_call.1} parent=0
    #allocation6 [shape = 'u8[8192]{0}', space=vmem, size = 0x2000, scoped, tag = 'input window, operand 0, single buffered']
    #allocation7 [shape = 's32[1]{0}', space=sflag, size = 0x4, scoped, tag = 'scoped memory for tpu_custom_call.1']
    #allocation8 [shape = 's32[1]{0}', space=sflag, size = 0x4, scoped, tag = 'scoped memory for tpu_custom_call.1']
    #allocation9 [shape = 'u8[8192]{0}', space=vmem, size = 0x2000, scoped, tag = 'input window, operand 1, single buffered']
    #allocation10 [shape = 's32[1]{0}', space=sflag, size = 0x4, scoped, tag = 'scoped memory for tpu_custom_call.1']
    #allocation11 [shape = 'u8[512]{0}', space=smem, size = 0x200, scoped, tag = 'output window, operand 0, single buffered']
    %7 = vsyncpa [#allocation7], 0
    %8 = vsyncpa [#allocation10], 0
    %9 = vsyncpa [#allocation8], 0
    // Predicated region
    $region2: #{tpu_custom_call.1} parent=1 // pred_check
      _
    $region3: #{tpu_custom_call.1} parent=1 // pred_check_branch
      %11 = sbr.rel (0) target = $region5
    $region4: #{tpu_custom_call.1} parent=1 // pred_region
      %s13 = ssub.s32 256, 256
      %14 = vsyncadd [#allocation7], %s13
      %s15 = sshll.u32 [#allocation6], 4
      %s16 = int_to_ptr.vmem [resolvable:$true] %s15
      %21 = dma.hbm_to_vmem [thread:$0]  %s0, 256, %s16, [#allocation7], 128, 128, 8
    $region5: #{tpu_custom_call.1} parent=1 // pred_fallthru
      _
    // Predicated region
    $region6: #{tpu_custom_call.1} parent=1 // pred_check
      _
    $region7: #{tpu_custom_call.1} parent=1 // pred_check_branch
      %23 = sbr.rel (0) target = $region9
    $region8: #{tpu_custom_call.1} parent=1 // pred_region
      %s25 = ssub.s32 256, 256
      %26 = vsyncadd [#allocation10], %s25
      %s27 = sshll.u32 [#allocation9], 4
      %s28 = int_to_ptr.vmem [resolvable:$true] %s27
      %33 = dma.hbm_to_vmem [thread:$0]  %s1, 256, %s28, [#allocation10], 128, 128, 8
    $region9: #{tpu_custom_call.1} parent=1 // pred_fallthru
      _
    // Predicated region
    $region10: #{tpu_custom_call.1} parent=1 // pred_check
      _
    $region11: #{tpu_custom_call.1} parent=1 // pred_check_branch
      %35 = sbr.rel (0) target = $region13
    $region12: #{tpu_custom_call.1} parent=1 // pred_region
      %36 = dma.done [#allocation7], 256
    $region13: #{tpu_custom_call.1} parent=1 // pred_fallthru
      _
    // Predicated region
    $region14: #{tpu_custom_call.1} parent=1 // pred_check
      _
    $region15: #{tpu_custom_call.1} parent=1 // pred_check_branch
      %38 = sbr.rel (0) target = $region17
    $region16: #{tpu_custom_call.1} parent=1 // pred_region
      %39 = dma.done [#allocation10], 256
    $region17: #{tpu_custom_call.1} parent=1 // pred_fallthru
      _
    %p40 = scmp.eq.s32.totalorder 0, 0
    // Predicated region
    $region18: #{tpu_custom_call.1} parent=1 // pred_check
      %p41 = pneg %p40
    $region19: #{tpu_custom_call.1} parent=1 // pred_check_branch
      %43 = sbr.rel (%p41) target = $region21
    $region20: #{tpu_custom_call.1} parent=1 // pred_region
      %44 = vst [vmem:[#allocation2] sm:$0x1] 0.0
      %45 = vst [vmem:[#allocation3] sm:$0x1] 0.0
      %46 = vst [vmem:[#allocation4] sm:$0x1] 0.0
      %47 = vst [vmem:[#allocation5] sm:$0x1] 0.0
    $region21: #{tpu_custom_call.1} parent=1 // pred_fallthru
      _
    %p48 = scmp.lt.s32.totalorder 0, 0
    // Predicated region
    $region22: #{tpu_custom_call.1} parent=1 // pred_check
      %p49 = pneg %p48
    $region23: #{tpu_custom_call.1} parent=1 // pred_check_branch
      %51 = sbr.rel (%p49) target = $region25
    $region24: #{tpu_custom_call.1} parent=1 // pred_region
      %v52 = vld [vmem:[#allocation6] sm:$0xff]
      %v53 = vld [vmem:[#allocation6 + $0x8] sm:$0xff]
      %v54 = vld [vmem:[#allocation9] sm:$0xff]
      %v55 = vld [vmem:[#allocation9 + $0x8] sm:$0xff]
      %v56 = vxor.u32 %v52, 2147483648
      %v57 = vxor.u32 %v53, 2147483648
      %v58 = vmul.f32 %v56, 1.442695
      %v59 = vpow.pop %v58
      %v60 = vmul.f32 %v57, 1.442695
      %v61 = vpow.pop %v60
      %v62 = vadd.f32 %v59, 1.0
      %v63 = vadd.f32 %v61, 1.0
      %v64 = vrcp.pop %v62
      %v65 = vmul.f32 1.0, %v64
      %v66 = vrcp.pop %v63
      %v67 = vmul.f32 1.0, %v66
      %v68 = vlog2.pop %v65
      %v69 = vmul.f32 %v68, 0.6931472
      %v70 = vlog2.pop %v67
      %v71 = vmul.f32 %v70, 0.6931472
      %v72 = vmax.f32 %v69, -100.0
      %v73 = vmax.f32 %v71, -100.0
      %v74 = vsub.f32 1.0, %v65
      %v75 = vsub.f32 1.0, %v67
      %v76 = vlog2.pop %v74
      %v77 = vmul.f32 %v76, 0.6931472
      %v78 = vlog2.pop %v75
      %v79 = vmul.f32 %v78, 0.6931472
      %v80 = vmax.f32 %v77, -100.0
      %v81 = vmax.f32 %v79, -100.0
      %v82 = vmul.f32 %v54, %v72
      %v83 = vmul.f32 %v55, %v73
      %v84 = vsub.f32 1.0, %v54
      %v85 = vsub.f32 1.0, %v55
      %v86 = vmul.f32 %v84, %v80
      %v87 = vmul.f32 %v85, %v81
      %v88 = vadd.f32 %v82, %v86
      %v89 = vadd.f32 %v83, %v87
      %v90 = vsub.f32 0.0, %v88
      %v91 = vsub.f32 0.0, %v89
      %v92 = vld [vmem:[#allocation2] sm:$0x1]
      %v93 = vmul.f32 %v65, %v54
      %v94 = vmul.f32 %v67, %v55
      %v95 = vadd.f32 %v93, %v94
      %v96 = vrot.slane %v95, 4
      %v97 = vadd.f32 %v95, %v96
      %v98 = vrot.slane %v97, 2
      %v99 = vadd.f32 %v97, %v98
      %v100 = vrot.slane %v99, 1
      %v101 = vadd.f32 %v99, %v100
      %v102 = vadd.f32 %v92, %v101
      %103 = vst [vmem:[#allocation2] sm:$0x1] %v102
      %v104 = vld [vmem:[#allocation3] sm:$0x1]
      %v105 = vadd.f32 %v65, %v67
      %v106 = vrot.slane %v105, 4
      %v107 = vadd.f32 %v105, %v106
      %v108 = vrot.slane %v107, 2
      %v109 = vadd.f32 %v107, %v108
      %v110 = vrot.slane %v109, 1
      %v111 = vadd.f32 %v109, %v110
      %v112 = vadd.f32 %v104, %v111
      %113 = vst [vmem:[#allocation3] sm:$0x1] %v112
      %v114 = vld [vmem:[#allocation4] sm:$0x1]
      %v115 = vadd.f32 %v54, %v55
      %v116 = vrot.slane %v115, 4
      %v117 = vadd.f32 %v115, %v116
      %v118 = vrot.slane %v117, 2
      %v119 = vadd.f32 %v117, %v118
      %v120 = vrot.slane %v119, 1
      %v121 = vadd.f32 %v119, %v120
      %v122 = vadd.f32 %v114, %v121
      %123 = vst [vmem:[#allocation4] sm:$0x1] %v122
      %v124 = vld [vmem:[#allocation5] sm:$0x1]
      %v125 = vadd.f32 %v90, %v91
      %v126 = vrot.slane %v125, 4
      %v127 = vadd.f32 %v125, %v126
      %v128 = vrot.slane %v127, 2
      %v129 = vadd.f32 %v127, %v128
      %v130 = vrot.slane %v129, 1
      %v131 = vadd.f32 %v129, %v130
      %v132 = vadd.f32 %v124, %v131
      %133 = vst [vmem:[#allocation5] sm:$0x1] %v132
    $region25: #{tpu_custom_call.1} parent=1 // pred_fallthru
      _
    // Predicated region
    $region26: #{tpu_custom_call.1} parent=1 // pred_check
      %p134 = pneg %p40
    $region27: #{tpu_custom_call.1} parent=1 // pred_check_branch
      %136 = sbr.rel (%p134) target = $region29
    $region28: #{tpu_custom_call.1} parent=1 // pred_region
      %v137 = vld [vmem:[#allocation6] sm:$0xff]
      %v138 = vld [vmem:[#allocation6 + $0x8] sm:$0xff]
      %v139 = vld [vmem:[#allocation9] sm:$0xff]
      %v140 = vld [vmem:[#allocation9 + $0x8] sm:$0xff]
      %s141 = smul.u32 0, 16
      %s142 = ssub.s32 16, %s141
      %v143 = vlaneseq
      %v144 = vshrl.u32 %v143, 7
      %v145 = vadd.s32 %v144, 8
      %v146 = vstv %s142
      %vm147 = vcmp.lt.s32.totalorder %v144, %v146
      %vm148 = vcmp.lt.s32.totalorder %v145, %v146
      %v149 = vsel %vm147, 1, 0
      %v150 = vsel %vm148, 1, 0
      %vm151 = vcmp.eq.s32.totalorder %v149, 1
      %vm152 = vcmp.eq.s32.totalorder %v150, 1
      %v153 = vsel %vm151, %v137, -10000.0
      %v154 = vsel %vm152, %v138, -10000.0
      %v155 = vsel %vm151, %v139, 0.0
      %v156 = vsel %vm152, %v140, 0.0
      %v157 = vxor.u32 %v153, 2147483648
      %v158 = vxor.u32 %v154, 2147483648
      %v159 = vmul.f32 %v157, 1.442695
      %v160 = vpow.pop %v159
      %v161 = vmul.f32 %v158, 1.442695
      %v162 = vpow.pop %v161
      %v163 = vadd.f32 %v160, 1.0
      %v164 = vadd.f32 %v162, 1.0
      %v165 = vrcp.pop %v163
      %v166 = vmul.f32 1.0, %v165
      %v167 = vrcp.pop %v164
      %v168 = vmul.f32 1.0, %v167
      %v169 = vlog2.pop %v166
      %v170 = vmul.f32 %v169, 0.6931472
      %v171 = vlog2.pop %v168
      %v172 = vmul.f32 %v171, 0.6931472
      %v173 = vmax.f32 %v170, -100.0
      %v174 = vmax.f32 %v172, -100.0
      %v175 = vsub.f32 1.0, %v166
      %v176 = vsub.f32 1.0, %v168
      %v177 = vlog2.pop %v175
      %v178 = vmul.f32 %v177, 0.6931472
      %v179 = vlog2.pop %v176
      %v180 = vmul.f32 %v179, 0.6931472
      %v181 = vmax.f32 %v178, -100.0
      %v182 = vmax.f32 %v180, -100.0
      %v183 = vmul.f32 %v155, %v173
      %v184 = vmul.f32 %v156, %v174
      %v185 = vsub.f32 1.0, %v155
      %v186 = vsub.f32 1.0, %v156
      %v187 = vmul.f32 %v185, %v181
      %v188 = vmul.f32 %v186, %v182
      %v189 = vadd.f32 %v183, %v187
      %v190 = vadd.f32 %v184, %v188
      %v191 = vsub.f32 0.0, %v189
      %v192 = vsub.f32 0.0, %v190
      %v193 = vld [vmem:[#allocation2] sm:$0x1]
      %v194 = vmul.f32 %v166, %v155
      %v195 = vmul.f32 %v168, %v156
      %v196 = vadd.f32 %v194, %v195
      %v197 = vrot.slane %v196, 4
      %v198 = vadd.f32 %v196, %v197
      %v199 = vrot.slane %v198, 2
      %v200 = vadd.f32 %v198, %v199
      %v201 = vrot.slane %v200, 1
      %v202 = vadd.f32 %v200, %v201
      %v203 = vadd.f32 %v193, %v202
      %204 = vst [vmem:[#allocation2] sm:$0x1] %v203
      %v205 = vld [vmem:[#allocation3] sm:$0x1]
      %v206 = vadd.f32 %v166, %v168
      %v207 = vrot.slane %v206, 4
      %v208 = vadd.f32 %v206, %v207
      %v209 = vrot.slane %v208, 2
      %v210 = vadd.f32 %v208, %v209
      %v211 = vrot.slane %v210, 1
      %v212 = vadd.f32 %v210, %v211
      %v213 = vadd.f32 %v205, %v212
      %214 = vst [vmem:[#allocation3] sm:$0x1] %v213
      %v215 = vld [vmem:[#allocation4] sm:$0x1]
      %v216 = vadd.f32 %v155, %v156
      %v217 = vrot.slane %v216, 4
      %v218 = vadd.f32 %v216, %v217
      %v219 = vrot.slane %v218, 2
      %v220 = vadd.f32 %v218, %v219
      %v221 = vrot.slane %v220, 1
      %v222 = vadd.f32 %v220, %v221
      %v223 = vadd.f32 %v215, %v222
      %224 = vst [vmem:[#allocation4] sm:$0x1] %v223
      %v225 = vld [vmem:[#allocation5] sm:$0x1]
      %v226 = vadd.f32 %v191, %v192
      %v227 = vrot.slane %v226, 4
      %v228 = vadd.f32 %v226, %v227
      %v229 = vrot.slane %v228, 2
      %v230 = vadd.f32 %v228, %v229
      %v231 = vrot.slane %v230, 1
      %v232 = vadd.f32 %v230, %v231
      %v233 = vadd.f32 %v225, %v232
      %234 = vst [vmem:[#allocation5] sm:$0x1] %v233
      %v235 = vld [vmem:[#allocation2] sm:$0x1]
      %vm236 = vcmask 1040384
      %v237 = vsel %vm236, %v235, 0.0
      %238 = vadd.xlane.f32.xlu0 %v237
      %v239 = vpop.xlane.xlu0 %238
      %v240 = vrot.slane %v239, 4
      %v241 = vadd.f32 %v239, %v240
      %v242 = vrot.slane %v241, 2
      %v243 = vadd.f32 %v241, %v242
      %v244 = vrot.slane %v243, 1
      %v245 = vadd.f32 %v243, %v244
      %s246 = vtos %v245
      %v247 = vld [vmem:[#allocation3] sm:$0x1]
      %v248 = vsel %vm236, %v247, 0.0
      %249 = vadd.xlane.f32.xlu0 %v248
      %v250 = vpop.xlane.xlu0 %249
      %v251 = vrot.slane %v250, 4
      %v252 = vadd.f32 %v250, %v251
      %v253 = vrot.slane %v252, 2
      %v254 = vadd.f32 %v252, %v253
      %v255 = vrot.slane %v254, 1
      %v256 = vadd.f32 %v254, %v255
      %s257 = vtos %v256
      %v258 = vld [vmem:[#allocation4] sm:$0x1]
      %v259 = vsel %vm236, %v258, 0.0
      %260 = vadd.xlane.f32.xlu0 %v259
      %v261 = vpop.xlane.xlu0 %260
      %v262 = vrot.slane %v261, 4
      %v263 = vadd.f32 %v261, %v262
      %v264 = vrot.slane %v263, 2
      %v265 = vadd.f32 %v263, %v264
      %v266 = vrot.slane %v265, 1
      %v267 = vadd.f32 %v265, %v266
      %s268 = vtos %v267
      %v269 = vld [vmem:[#allocation5] sm:$0x1]
      %v270 = vsel %vm236, %v269, 0.0
      %271 = vadd.xlane.f32.xlu0 %v270
      %v272 = vpop.xlane.xlu0 %271
      %v273 = vrot.slane %v272, 4
      %v274 = vadd.f32 %v272, %v273
      %v275 = vrot.slane %v274, 2
      %v276 = vadd.f32 %v274, %v275
      %v277 = vrot.slane %v276, 1
      %v278 = vadd.f32 %v276, %v277
      %s279 = vtos %v278
      %v280 = vrcp.pop 2048.0
      %s281 = vtos %v280
      %s282 = smul.f32 %s279, %s281
      %s283 = smul.f32 %s246, 2.0
      %s284 = sadd.f32 %s283, 1.0
      %s285 = sadd.f32 %s257, %s268
      %s286 = sadd.f32 %s285, 1.0
      %v287 = vstv %s286
      %v288 = vrcp.pop %v287
      %s289 = vtos %v288
      %s290 = smul.f32 %s284, %s289
      %s291 = ssub.f32 1.0, %s290
      %s292 = sadd.f32 %s282, %s291
      %s293 = scalar_lea.smem [#allocation11], 0
      %294 = sst [smem:[%s293]] %s292
    $region29: #{tpu_custom_call.1} parent=1 // pred_fallthru
      _
    // Predicated region
    $region30: #{tpu_custom_call.1} parent=1 // pred_check
      _
    $region31: #{tpu_custom_call.1} parent=1 // pred_check_branch
      %296 = sbr.rel (0) target = $region33
    $region32: #{tpu_custom_call.1} parent=1 // pred_region
      %s298 = ssub.s32 16, 16
      %299 = vsyncadd [#allocation8], %s298
      %302 = dma.smem_to_hbm [#allocation11], 16, %s2, [#allocation8]
    $region33: #{tpu_custom_call.1} parent=1 // pred_fallthru
      _
    // Predicated region
    $region34: #{tpu_custom_call.1} parent=1 // pred_check
      _
    $region35: #{tpu_custom_call.1} parent=1 // pred_check_branch
      %304 = sbr.rel (0) target = $region37
    $region36: #{tpu_custom_call.1} parent=1 // pred_region
      %305 = dma.done [#allocation8], 16
    $region37: #{tpu_custom_call.1} parent=1 // pred_fallthru
      _
    %306 = sfence
    %307 = vsyncpa [#allocation7], 1
    %308 = vsyncpa [#allocation10], 1
    %309 = vsyncpa [#allocation8], 1

</llo_original>
